<compile_context>
chip_gen: v7x
topology: tpu7x:2x2x1
jax: 0.10.0
libtpu: 0.0.40
codegen_flags: <defaults>
</compile_context>

<pallas_src>
import functools

import jax
import jax.numpy as jnp
from jax.experimental import pallas as pl
from jax.experimental.pallas import tpu as pltpu

_LANES = 128


def _dice_partial_kernel(x_ref, t_ref, inter_ref, tot_ref, *, bm, valid_rows):
    """Per-block partial sums for soft Dice.

    Loads one (bm, 128) tile of inputs/targets, forms x*t and x+t, folds them
    down to an (8, 128) partial (pure VPU adds along the sublane-block axis),
    and writes the partials to this grid step's own output block.  No state is
    carried across grid steps, so the grid axis is safely "parallel".
    """
    i = pl.program_id(0)

    x = x_ref[...].astype(jnp.float32)
    t = t_ref[...].astype(jnp.float32)

    # Ragged tail: the final block may read past the end of the array (Pallas
    # leaves that region undefined), so mask rows >= valid_rows.  This branch
    # is resolved at trace time; inputs that tile evenly pay nothing.
    if valid_rows % bm != 0:
        row = i * bm + jax.lax.broadcasted_iota(jnp.int32, (bm, _LANES), 0)
        keep = row < valid_rows
        x = jnp.where(keep, x, 0.0)
        t = jnp.where(keep, t, 0.0)

    prod = x * t   # -> intersection partial
    ssum = x + t   # -> inputs.sum() + targets.sum() partial

    if bm % 8 == 0 and bm > 8:
        # Fold (bm, 128) -> (8, 128): splits only the major axis (tile-aligned,
        # no relayout) and reduces with VPU adds -- no cross-lane reduce and no
        # SMEM load/add/store chain in the steady state.
        prod = prod.reshape(bm // 8, 8, _LANES).sum(axis=0)
        ssum = ssum.reshape(bm // 8, 8, _LANES).sum(axis=0)

    inter_ref[0] = prod
    tot_ref[0] = ssum


def dice_loss(inputs, targets, smooth=1.0, block_rows=4096):
    """Pallas implementation of DiceLoss.forward(inputs, targets, smooth)."""
    x = inputs.reshape(-1)
    t = targets.reshape(-1)
    n = x.shape[0]

    # Lane alignment: view the stream as [rows, 128].  Only pad (with zeros,
    # neutral for every sum) when n is not a multiple of 128; common NCHW
    # segmentation shapes need no copy at all.
    # TODO(synk): a manual-DMA (pl.ANY) path could avoid even this small-pad copy.
    rem = n % _LANES
    if rem:
        pad = _LANES - rem
        x = jnp.pad(x, (0, pad))
        t = jnp.pad(t, (0, pad))
    rows = x.shape[0] // _LANES
    x2 = x.reshape(rows, _LANES)
    t2 = t.reshape(rows, _LANES)

    # Block size: big streaming tiles (HBM-bound).  When we actually tile, the
    # block row count must be a multiple of 8; otherwise use one full-extent block.
    if rows <= block_rows:
        bm = rows
    else:
        bm = max(8, (block_rows // 8) * 8)
    grid = pl.cdiv(rows, bm)
    pr = 8 if bm % 8 == 0 else bm   # partial-sum block rows

    kernel = functools.partial(_dice_partial_kernel, bm=bm, valid_rows=rows)

    # Double-buffered inputs + generous headroom for outputs/overheads.
    in_bytes = 2 * bm * _LANES * (x2.dtype.itemsize + t2.dtype.itemsize)
    vmem_limit = int(in_bytes + (8 << 20))

    inter_p, tot_p = pl.pallas_call(
        kernel,
        out_shape=(
            jax.ShapeDtypeStruct((grid, pr, _LANES), jnp.float32),
            jax.ShapeDtypeStruct((grid, pr, _LANES), jnp.float32),
        ),
        grid_spec=pltpu.PrefetchScalarGridSpec(
            num_scalar_prefetch=0,
            grid=(grid,),
            in_specs=[
                pl.BlockSpec((bm, _LANES), lambda i: (i, 0)),
                pl.BlockSpec((bm, _LANES), lambda i: (i, 0)),
            ],
            out_specs=[
                pl.BlockSpec((1, pr, _LANES), lambda i: (i, 0, 0)),
                pl.BlockSpec((1, pr, _LANES), lambda i: (i, 0, 0)),
            ],
        ),
        compiler_params=pltpu.CompilerParams(
            dimension_semantics=("parallel",),  # no carried state -> megacore OK (v7x)
            vmem_limit_bytes=vmem_limit,
        ),
    )(x2, t2)

    # Tiny epilogue: combine per-block partials and form the loss.
    intersection = jnp.sum(inter_p)
    total = jnp.sum(tot_p)
    smooth = jnp.float32(smooth)
    dice = (2.0 * intersection + smooth) / (total + smooth)
    return jnp.float32(1.0) - dice


def dice_loss_ref(inputs, targets, smooth=1.0):
    x = inputs.reshape(-1).astype(jnp.float32)
    t = targets.reshape(-1).astype(jnp.float32)
    inter = jnp.sum(x * t)
    dice = (2.0 * inter + smooth) / (jnp.sum(x) + jnp.sum(t) + smooth)
    return 1.0 - dice


if __name__ == "__main__":
    key = jax.random.PRNGKey(0)
    k1, k2, k3, k4 = jax.random.split(key, 4)

    # Primary case: NCHW segmentation-style probabilities/labels.
    inputs = jax.nn.sigmoid(jax.random.normal(k1, (2, 4, 16, 16), jnp.float32))
    targets = (jax.random.uniform(k2, (2, 4, 16, 16)) > 0.5).astype(jnp.float32)
    out = jax.block_until_ready(dice_loss(inputs, targets, smooth=1.0))
    ref = jax.block_until_ready(dice_loss_ref(inputs, targets, smooth=1.0))
    assert jnp.allclose(out, ref, rtol=1e-5, atol=1e-5), (out, ref)

    # Multi-block grid + ragged final block (small block_rows to force it).
    x2 = jax.nn.sigmoid(jax.random.normal(k3, (2, 2, 5, 128), jnp.float32))
    t2 = (jax.random.uniform(k4, (2, 2, 5, 128)) > 0.5).astype(jnp.float32)
    out2 = jax.block_until_ready(dice_loss(x2, t2, smooth=1.0, block_rows=16))
    ref2 = jax.block_until_ready(dice_loss_ref(x2, t2, smooth=1.0))
    assert jnp.allclose(out2, ref2, rtol=1e-5, atol=1e-5), (out2, ref2)

    # Element count not a multiple of 128 (exercises the lane-pad path).
    x3 = jax.nn.sigmoid(jax.random.normal(k1, (3, 5, 7), jnp.float32))
    t3 = (jax.random.uniform(k2, (3, 5, 7)) > 0.5).astype(jnp.float32)
    out3 = jax.block_until_ready(dice_loss(x3, t3, smooth=1.0))
    ref3 = jax.block_until_ready(dice_loss_ref(x3, t3, smooth=1.0))
    assert jnp.allclose(out3, ref3, rtol=1e-5, atol=1e-5), (out3, ref3)

    print("KERNEL_OK")
</pallas_src>

<mosaic_0001>
module attributes {stable_mosaic.version = 11 : i64} {
  func.func @_dice_partial_kernel(%arg0: i32, %arg1: memref<16x128xf32, #tpu.memory_space<vmem>>, %arg2: memref<16x128xf32, #tpu.memory_space<vmem>>, %arg3: memref<1x8x128xf32, #tpu.memory_space<vmem>>, %arg4: memref<1x8x128xf32, #tpu.memory_space<vmem>>) attributes {dimension_semantics = [#tpu.dimension_semantics<parallel>], iteration_bounds = array<i64: 1>, scalar_prefetch = 0 : i64, scratch_operands = 0 : i64, tpu.core_type = #tpu.core_type<tc>, window_params = [{transform_indices = @transform_0, window_bounds = array<i64: 16, 128>}, {transform_indices = @transform_1, window_bounds = array<i64: 16, 128>}, {transform_indices = @transform_2, window_bounds = array<i64: 1, 8, 128>}, {transform_indices = @transform_3, window_bounds = array<i64: 1, 8, 128>}]} {
    %c0 = arith.constant 0 : index
    %c0_0 = arith.constant 0 : index
    %0 = vector.load %arg1[%c0, %c0_0] : memref<16x128xf32, #tpu.memory_space<vmem>>, vector<16x128xf32>
    %c0_1 = arith.constant 0 : index
    %c0_2 = arith.constant 0 : index
    %1 = vector.load %arg2[%c0_1, %c0_2] : memref<16x128xf32, #tpu.memory_space<vmem>>, vector<16x128xf32>
    %2 = arith.mulf %0, %1 : vector<16x128xf32>
    %3 = arith.addf %0, %1 : vector<16x128xf32>
    %4 = vector.shape_cast %2 : vector<16x128xf32> to vector<2x8x128xf32>
    %cst = arith.constant dense<0.000000e+00> : vector<8x128xf32>
    %5 = vector.multi_reduction <add>, %4, %cst [0] : vector<2x8x128xf32> to vector<8x128xf32>
    %6 = vector.shape_cast %3 : vector<16x128xf32> to vector<2x8x128xf32>
    %cst_3 = arith.constant dense<0.000000e+00> : vector<8x128xf32>
    %7 = vector.multi_reduction <add>, %6, %cst_3 [0] : vector<2x8x128xf32> to vector<8x128xf32>
    %c0_4 = arith.constant 0 : index
    %c0_5 = arith.constant 0 : index
    %c0_6 = arith.constant 0 : index
    %8 = vector.load %arg3[%c0_4, %c0_5, %c0_6] : memref<1x8x128xf32, #tpu.memory_space<vmem>>, vector<1x8x128xf32>
    %9 = vector.shape_cast %8 : vector<1x8x128xf32> to vector<8x128xf32>
    %10 = vector.shape_cast %5 : vector<8x128xf32> to vector<1x8x128xf32>
    tpu.vector_store %arg3[%c0_4, %c0_5, %c0_6], %10 {strides = array<i32>} : memref<1x8x128xf32, #tpu.memory_space<vmem>>, vector<1x8x128xf32>,
    %c0_7 = arith.constant 0 : index
    %c0_8 = arith.constant 0 : index
    %c0_9 = arith.constant 0 : index
    %11 = vector.load %arg4[%c0_7, %c0_8, %c0_9] : memref<1x8x128xf32, #tpu.memory_space<vmem>>, vector<1x8x128xf32>
    %12 = vector.shape_cast %11 : vector<1x8x128xf32> to vector<8x128xf32>
    %13 = vector.shape_cast %7 : vector<8x128xf32> to vector<1x8x128xf32>
    tpu.vector_store %arg4[%c0_7, %c0_8, %c0_9], %13 {strides = array<i32>} : memref<1x8x128xf32, #tpu.memory_space<vmem>>, vector<1x8x128xf32>,
    return
  }
  func.func @transform_0(%arg0: i32) -> (i32, i32) {
    %c0_i32 = arith.constant 0 : i32
    %c0_i32_0 = arith.constant 0 : i32
    return %arg0, %c0_i32 : i32, i32
  }
  func.func @transform_1(%arg0: i32) -> (i32, i32) {
    %c0_i32 = arith.constant 0 : i32
    %c0_i32_0 = arith.constant 0 : i32
    return %arg0, %c0_i32 : i32, i32
  }
  func.func @transform_2(%arg0: i32) -> (i32, i32, i32) {
    %c0_i32 = arith.constant 0 : i32
    %c0_i32_0 = arith.constant 0 : i32
    %c0_i32_1 = arith.constant 0 : i32
    return %arg0, %c0_i32, %c0_i32_0 : i32, i32, i32
  }
  func.func @transform_3(%arg0: i32) -> (i32, i32, i32) {
    %c0_i32 = arith.constant 0 : i32
    %c0_i32_0 = arith.constant 0 : i32
    %c0_i32_1 = arith.constant 0 : i32
    return %arg0, %c0_i32, %c0_i32_0 : i32, i32, i32
  }
}

</mosaic_0001>

<llo_original>
// kernel: tpu_custom_call.1
$region0: #{tpu_custom_call.1}
  #allocation0 [shape = 'u32[]', space=smem, size = 0x4, offset = 0x4, fixed_abs, tag = 'smem constant byte address 0x4 - core index']
  #allocation1 [shape = 'u32[144,128]{1,0:T(1,128)}', space=vmem, size = 0x12000, scoped, tag = 'internal scratch']
  %s0 = inlined_call_operand.hbm [shape: f32[16,128], index: 0, kind: input, shape index: {}]
  %s1 = inlined_call_operand.hbm [shape: f32[16,128], index: 1, kind: input, shape index: {}]
  %s2 = inlined_call_operand.hbm [shape: f32[1,8,128], index: 2, kind: output, shape index: {0}]
  %s3 = inlined_call_operand.hbm [shape: f32[1,8,128], index: 3, kind: output, shape index: {1}]
  %4 = xla_tuple %s2, %s3
  %s5 = sld [smem:[#allocation0]]
  $region34: #{tpu_custom_call.1} parent=0
    _
  %s7 = ssub.s32 1, %s5
  %s8 = scalar_select 0, %s7, %s5
  $region1: #{tpu_custom_call.1} parent=0
    #allocation2 [shape = 'u8[8192]{0}', space=vmem, size = 0x2000, scoped, tag = 'input window, operand 0, single buffered']
    #allocation3 [shape = 's32[1]{0}', space=sflag, size = 0x4, scoped, tag = 'scoped memory for tpu_custom_call.1']
    #allocation4 [shape = 's32[1]{0}', space=sflag, size = 0x4, scoped, tag = 'scoped memory for tpu_custom_call.1']
    #allocation5 [shape = 'u8[8192]{0}', space=vmem, size = 0x2000, scoped, tag = 'input window, operand 1, single buffered']
    #allocation6 [shape = 's32[1]{0}', space=sflag, size = 0x4, scoped, tag = 'scoped memory for tpu_custom_call.1']
    #allocation7 [shape = 'u8[4096]{0}', space=vmem, size = 0x1000, scoped, tag = 'output window, operand 0, single buffered']
    #allocation8 [shape = 'u8[4096]{0}', space=vmem, size = 0x1000, scoped, tag = 'output window, operand 1, single buffered']
    #allocation9 [shape = 's32[1]{0}', space=sflag, size = 0x4, scoped, tag = 'scoped memory for tpu_custom_call.1']
    %9 = vsyncpa [#allocation3], 0
    %10 = vsyncpa [#allocation6], 0
    %11 = vsyncpa [#allocation4], 0
    %12 = vsyncpa [#allocation9], 0
    // Predicated region
    $region2: #{tpu_custom_call.1} parent=1 // pred_check
      _
    $region3: #{tpu_custom_call.1} parent=1 // pred_check_branch
      %14 = sbr.rel (0) target = $region5
    $region4: #{tpu_custom_call.1} parent=1 // pred_region
      %s16 = ssub.s32 256, 256
      %17 = vsyncadd [#allocation3], %s16
      %s18 = sshll.u32 [#allocation2], 4
      %s19 = int_to_ptr.vmem [resolvable:$true] %s18
      %24 = dma.hbm_to_vmem [thread:$0]  %s0, 256, %s19, [#allocation3], 128, 128, 8
    $region5: #{tpu_custom_call.1} parent=1 // pred_fallthru
      _
    // Predicated region
    $region6: #{tpu_custom_call.1} parent=1 // pred_check
      _
    $region7: #{tpu_custom_call.1} parent=1 // pred_check_branch
      %26 = sbr.rel (0) target = $region9
    $region8: #{tpu_custom_call.1} parent=1 // pred_region
      %s28 = ssub.s32 256, 256
      %29 = vsyncadd [#allocation6], %s28
      %s30 = sshll.u32 [#allocation5], 4
      %s31 = int_to_ptr.vmem [resolvable:$true] %s30
      %36 = dma.hbm_to_vmem [thread:$0]  %s1, 256, %s31, [#allocation6], 128, 128, 8
    $region9: #{tpu_custom_call.1} parent=1 // pred_fallthru
      _
    // Predicated region
    $region10: #{tpu_custom_call.1} parent=1 // pred_check
      _
    $region11: #{tpu_custom_call.1} parent=1 // pred_check_branch
      %38 = sbr.rel (0) target = $region13
    $region12: #{tpu_custom_call.1} parent=1 // pred_region
      %39 = dma.done [#allocation3], 256
    $region13: #{tpu_custom_call.1} parent=1 // pred_fallthru
      _
    // Predicated region
    $region14: #{tpu_custom_call.1} parent=1 // pred_check
      _
    $region15: #{tpu_custom_call.1} parent=1 // pred_check_branch
      %41 = sbr.rel (0) target = $region17
    $region16: #{tpu_custom_call.1} parent=1 // pred_region
      %42 = dma.done [#allocation6], 256
    $region17: #{tpu_custom_call.1} parent=1 // pred_fallthru
      _
    %v43 = vld [vmem:[#allocation2] sm:$0xff]
    %v44 = vld [vmem:[#allocation2 + $0x8] sm:$0xff]
    %v45 = vld [vmem:[#allocation5] sm:$0xff]
    %v46 = vld [vmem:[#allocation5 + $0x8] sm:$0xff]
    %v47 = vmul.f32 %v43, %v45
    %v48 = vmul.f32 %v44, %v46
    %v49 = vadd.f32 %v43, %v45
    %v50 = vadd.f32 %v44, %v46
    %v51 = vadd.f32 %v47, %v48
    %v52 = vadd.f32 %v49, %v50
    %53 = vst [vmem:[#allocation7] sm:$0xff] %v51
    %54 = vst [vmem:[#allocation8] sm:$0xff] %v52
    // Predicated region
    $region18: #{tpu_custom_call.1} parent=1 // pred_check
      _
    $region19: #{tpu_custom_call.1} parent=1 // pred_check_branch
      %56 = sbr.rel (0) target = $region21
    $region20: #{tpu_custom_call.1} parent=1 // pred_region
      %s58 = ssub.s32 128, 128
      %59 = vsyncadd [#allocation4], %s58
      %s61 = sshll.u32 [#allocation7], 4
      %s62 = int_to_ptr.vmem [resolvable:$true] %s61
      %64 = dma.vmem_to_hbm [thread:$0]  %s62, 128, %s2, [#allocation4]
    $region21: #{tpu_custom_call.1} parent=1 // pred_fallthru
      _
    // Predicated region
    $region22: #{tpu_custom_call.1} parent=1 // pred_check
      _
    $region23: #{tpu_custom_call.1} parent=1 // pred_check_branch
      %66 = sbr.rel (0) target = $region25
    $region24: #{tpu_custom_call.1} parent=1 // pred_region
      %s68 = ssub.s32 128, 128
      %69 = vsyncadd [#allocation9], %s68
      %s71 = sshll.u32 [#allocation8], 4
      %s72 = int_to_ptr.vmem [resolvable:$true] %s71
      %74 = dma.vmem_to_hbm [thread:$0]  %s72, 128, %s3, [#allocation9]
    $region25: #{tpu_custom_call.1} parent=1 // pred_fallthru
      _
    // Predicated region
    $region26: #{tpu_custom_call.1} parent=1 // pred_check
      _
    $region27: #{tpu_custom_call.1} parent=1 // pred_check_branch
      %76 = sbr.rel (0) target = $region29
    $region28: #{tpu_custom_call.1} parent=1 // pred_region
      %77 = dma.done [#allocation4], 128
    $region29: #{tpu_custom_call.1} parent=1 // pred_fallthru
      _
    // Predicated region
    $region30: #{tpu_custom_call.1} parent=1 // pred_check
      _
    $region31: #{tpu_custom_call.1} parent=1 // pred_check_branch
      %79 = sbr.rel (0) target = $region33
    $region32: #{tpu_custom_call.1} parent=1 // pred_region
      %80 = dma.done [#allocation9], 128
    $region33: #{tpu_custom_call.1} parent=1 // pred_fallthru
      _
    %81 = vsyncpa [#allocation3], 1
    %82 = vsyncpa [#allocation6], 1
    %83 = vsyncpa [#allocation4], 1
    %84 = vsyncpa [#allocation9], 1

</llo_original>
